<compile_context>
chip_gen: v7x
topology: tpu7x:2x2x1
jax: 0.10.0
libtpu: 0.0.40
codegen_flags: <defaults>
</compile_context>

<pallas_src>
import jax
import jax.numpy as jnp
from jax.experimental import pallas as pl
from jax.experimental.pallas import tpu as pltpu


_FEATURES = {}  # one-time probe / budget cache


def _probe(name, fn):
    """Run `fn` once; cache whether it compiled AND produced correct values."""
    if name not in _FEATURES:
        try:
            _FEATURES[name] = bool(fn())
        except Exception:
            _FEATURES[name] = False
    return _FEATURES[name]


# --------------------------------------------------------------------------- #
# Kernels (pure data movement; XLU/VPU easily keep up with the DMA path).
# --------------------------------------------------------------------------- #
def _transpose_kernel(x_ref, o_ref):
    # x_ref: (tm, tn) tile, o_ref: (tn, tm) tile (batch dim squeezed away).
    o_ref[...] = x_ref[...].T


def _nchw_to_nhwc_dense_kernel(x_ref, o_ref):
    # x_ref: (C, tn).  o_ref: (tn//128, 128*C): row r holds the (128, C) slab
    # for spatial positions [r*128, (r+1)*128) in (l-major, c-minor) order,
    # i.e. exactly the contiguous NHWC memory for those positions, so the
    # writeback DMA is fully lane-dense.
    c, tn = x_ref.shape
    o_ref[...] = x_ref[...].T.reshape(tn // 128, 128 * c)


def _nhwc_to_nchw_dense_kernel(x_ref, o_ref):
    # x_ref: (tm//128, 128*C) lane-dense view of NHWC.  o_ref: (C, tm).
    c, tm = o_ref.shape
    o_ref[...] = x_ref[...].reshape(tm, c).T


# --------------------------------------------------------------------------- #
# Spec / builder helpers
# --------------------------------------------------------------------------- #
def _block_spec(block_shape, index_map, buffers=None):
    """BlockSpec with optional deeper pipelining; falls back if the
    pipeline_mode kwarg / pl.Buffered is unavailable in this jax version."""
    if buffers is not None and buffers != 2:
        try:
            return pl.BlockSpec(block_shape, index_map,
                                pipeline_mode=pl.Buffered(int(buffers)))
        except Exception:
            pass
    return pl.BlockSpec(block_shape, index_map)


def _plain_transpose_3d(x3, tm, tn, *, vmem_limit=None, buffers=None):
    """(B, M, N) -> (B, N, M) with (tm, tn) input tiles / (tn, tm) output
    tiles.  Tiles need not divide the extents (edge blocks are masked)."""
    B, M, N = x3.shape
    assert tm == M or tm % 128 == 0, tm
    assert tn == N or tn % 128 == 0, tn
    gm, gn = pl.cdiv(M, tm), pl.cdiv(N, tn)
    itemsize = jnp.dtype(x3.dtype).itemsize
    return pl.pallas_call(
        _transpose_kernel,
        out_shape=jax.ShapeDtypeStruct((B, N, M), x3.dtype),
        grid_spec=pltpu.PrefetchScalarGridSpec(
            num_scalar_prefetch=0,
            grid=(B, gm, gn),
            in_specs=[_block_spec((pl.Squeezed(), tm, tn),
                                  lambda b, i, j: (b, i, j), buffers)],
            out_specs=_block_spec((pl.Squeezed(), tn, tm),
                                  lambda b, i, j: (b, j, i), buffers)),
        compiler_params=pltpu.CompilerParams(
            dimension_semantics=("parallel", "parallel", "parallel"),
            vmem_limit_bytes=vmem_limit),
        cost_estimate=pl.CostEstimate(
            flops=0, transcendentals=0,
            bytes_accessed=2 * x3.size * itemsize),
    )(x3)


def _nchw_to_nhwc_dense(x3, tn, *, vmem_limit=None, buffers=None):
    """(B, C, L) -> (B, L//128, 128*C) holding the NHWC memory layout
    (lane-dense writeback); caller reshapes to (B, H, W, C) for free."""
    B, C, L = x3.shape
    assert L % 128 == 0 and tn % 128 == 0 and (tn == L or tn % 1024 == 0), tn
    R = tn // 128
    gl = pl.cdiv(L, tn)
    itemsize = jnp.dtype(x3.dtype).itemsize
    return pl.pallas_call(
        _nchw_to_nhwc_dense_kernel,
        out_shape=jax.ShapeDtypeStruct((B, L // 128, 128 * C), x3.dtype),
        grid_spec=pltpu.PrefetchScalarGridSpec(
            num_scalar_prefetch=0,
            grid=(B, gl),
            in_specs=[_block_spec((pl.Squeezed(), C, tn),
                                  lambda b, j: (b, 0, j), buffers)],
            out_specs=_block_spec((pl.Squeezed(), R, 128 * C),
                                  lambda b, j: (b, j, 0), buffers)),
        compiler_params=pltpu.CompilerParams(
            dimension_semantics=("parallel", "parallel"),
            vmem_limit_bytes=vmem_limit),
        cost_estimate=pl.CostEstimate(
            flops=0, transcendentals=0,
            bytes_accessed=2 * x3.size * itemsize),
    )(x3)


def _nhwc_to_nchw_dense(x3, tm, *, vmem_limit=None, buffers=None):
    """(B, L, C) -> (B, C, L), reading the input through its lane-dense
    (B, L//128, 128*C) view (full-lane read DMAs)."""
    B, L, C = x3.shape
    assert L % 128 == 0 and tm % 128 == 0 and (tm == L or tm % 1024 == 0), tm
    R = tm // 128
    gl = pl.cdiv(L, tm)
    itemsize = jnp.dtype(x3.dtype).itemsize
    x_view = x3.reshape(B, L // 128, 128 * C)   # same row-major bytes, free
    return pl.pallas_call(
        _nhwc_to_nchw_dense_kernel,
        out_shape=jax.ShapeDtypeStruct((B, C, L), x3.dtype),
        grid_spec=pltpu.PrefetchScalarGridSpec(
            num_scalar_prefetch=0,
            grid=(B, gl),
            in_specs=[_block_spec((pl.Squeezed(), R, 128 * C),
                                  lambda b, j: (b, j, 0), buffers)],
            out_specs=_block_spec((pl.Squeezed(), C, tm),
                                  lambda b, j: (b, 0, j), buffers)),
        compiler_params=pltpu.CompilerParams(
            dimension_semantics=("parallel", "parallel"),
            vmem_limit_bytes=vmem_limit),
        cost_estimate=pl.CostEstimate(
            flops=0, transcendentals=0,
            bytes_accessed=2 * x3.size * itemsize),
    )(x_view)


# --------------------------------------------------------------------------- #
# One-time feature probes (tiny compiles; value-checked, not just compiled).
# --------------------------------------------------------------------------- #
def _supports_buffered():
    def probe():
        x = jnp.arange(8 * 256, dtype=jnp.float32).reshape(1, 8, 256)
        y = _plain_transpose_3d(x, 8, 128, buffers=3)
        return bool(jnp.array_equal(y, jnp.swapaxes(x, 1, 2)))
    return _probe("buffered3", probe)


def _supports_uneven():
    def probe():
        x = jnp.arange(8 * 320, dtype=jnp.float32).reshape(1, 8, 320)
        y = _plain_transpose_3d(x, 8, 256)          # 320 = 256 + masked edge
        return bool(jnp.array_equal(y, jnp.swapaxes(x, 1, 2)))
    return _probe("uneven_blocks", probe)


def _supports_dense_fwd():
    def probe():
        x = jnp.arange(4 * 256, dtype=jnp.float32).reshape(1, 4, 256)
        y = _nchw_to_nhwc_dense(x, 256)
        ref = jnp.swapaxes(x, 1, 2).reshape(1, 2, 512)
        return bool(jnp.array_equal(y, ref))
    return _probe("dense_fwd", probe)


def _supports_dense_bwd():
    def probe():
        x = jnp.arange(256 * 8, dtype=jnp.float32).reshape(1, 256, 8)
        y = _nhwc_to_nchw_dense(x, 256)
        return bool(jnp.array_equal(y, jnp.swapaxes(x, 1, 2)))
    return _probe("dense_bwd", probe)


# --------------------------------------------------------------------------- #
# Generation-aware sizing
# --------------------------------------------------------------------------- #
def _vmem_budget():
    """(tile_target_bytes, vmem_limit_bytes) derived from the chip's VMEM."""
    if "budget" not in _FEATURES:
        try:
            info = pltpu.get_tpu_info()
            vmem_phys = int(getattr(info, "vmem_capacity_bytes", 64 << 20))
        except Exception:
            vmem_phys = 64 << 20            # assume the tightest chip (v7x)
        vmem_limit = min(vmem_phys * 3 // 4, 96 << 20)   # 48 MiB v7x, 96 MiB v5e/v6e
        tile_target = min(8 << 20, vmem_limit // 8)      # room for 3 in + 3 out bufs
        _FEATURES["budget"] = (tile_target, vmem_limit)
    return _FEATURES["budget"]


def _fits(t0, t1, itemsize, buffers, vmem_limit, slack=4 << 20):
    nbuf = buffers or 2
    if vmem_limit is None:
        vmem_limit = 32 << 20
    return 2 * nbuf * t0 * t1 * itemsize + slack <= vmem_limit


def _pick_tiles(M, N, itemsize, target_bytes, uneven_ok):
    """Tile sizes (tm, tn) for the plain (M, N) -> (N, M) transpose.  Every
    tile dim is either the full extent or a multiple of 128."""
    max_elems = max(128 * 128, target_bytes // max(1, itemsize))

    def one(extent, elems, prefer_split):
        if extent <= 256:
            return extent                            # keep small axes whole
        t = max(128, (min(elems, extent) // 128) * 128)
        if t >= extent:
            if prefer_split:
                # Full extent fits the budget; still prefer >= 2 tiles so the
                # DMA pipeline has steps (and v7x can split across cores).
                half = 128 * pl.cdiv(pl.cdiv(extent, 2), 128)
                if half < extent and (uneven_ok or extent % half == 0):
                    return half
            return extent
        if not uneven_ok and extent % t != 0:
            if extent % 128 == 0:
                while t > 128 and extent % t != 0:
                    t -= 128
                if extent % t == 0:
                    return t
            return extent                            # caller's budget check decides
        return t

    if M <= 256 and N <= 256:
        return M, N
    if M <= 256:
        return M, one(N, max_elems // max(1, M), True)
    if N <= 256:
        return one(M, max_elems // max(1, N), True), N
    side = 128 * max(1, int((max_elems ** 0.5) // 128))
    return one(M, side, False), one(N, side, True)


def _pick_dense_tn(L, C, itemsize, target_bytes, uneven_ok):
    """Spatial tile for the lane-dense kernels: a multiple of 1024 (so the
    (L//128)-axis block dim is a multiple of 8) or the full extent."""
    if L % 128 != 0:
        return None
    budget = max(1024, target_bytes // max(1, C * itemsize))
    tn = min(budget, L) // 1024 * 1024
    if tn >= L:
        tn = L
    if 0 < tn < L and not uneven_ok and L % tn != 0:
        t = tn
        while t >= 1024 and L % t != 0:
            t -= 1024
        tn = t if (t >= 1024 and L % t == 0) else L
    if tn < 1024:
        tn = L                                   # small L: one block per batch
    elif tn == L and L >= 2048 and L % 1024 == 0:
        half = (L // 2) // 1024 * 1024
        if half >= 1024 and (uneven_ok or L % half == 0):
            tn = half                            # keep >= 2 pipeline steps
    return tn


# --------------------------------------------------------------------------- #
# Public wrapper: Pallas equivalent of torch `x.permute(*dims)`
# --------------------------------------------------------------------------- #
def permute_pallas(x, dims, *, force_pallas=False, l_tile=None,
                   small_bytes=256 * 1024):
    dims = tuple(int(d) % x.ndim for d in dims)
    if x.ndim != 4 or dims not in ((0, 2, 3, 1), (0, 3, 1, 2)):
        # TODO(synk): general permutations stay on XLA's transpose; only the
        # NCHW<->NHWC pairs used by reference_compress.py get a Pallas path.
        return jnp.transpose(x, dims)

    itemsize = jnp.dtype(x.dtype).itemsize
    if (x.size * itemsize < small_bytes) and not force_pallas:
        return jnp.transpose(x, dims)            # launch overhead dominates

    tile_target, vmem_limit = _vmem_budget()
    buffers = 3 if _supports_buffered() else None
    uneven_ok = _supports_uneven()

    if dims == (0, 2, 3, 1):                     # NCHW -> NHWC
        B, C, H, W = x.shape
        L = H * W
        x3 = x.reshape(B, C, L)
        # Lane-dense writeback for narrow channel counts (the module's typical
        # C=3/4/8 case): avoids masked partial stores / narrow writeback DMAs.
        if (l_tile is None and itemsize == 4 and C < 128 and L % 128 == 0
                and _supports_dense_fwd()):
            tn = _pick_dense_tn(L, C, itemsize, tile_target, uneven_ok)
            if tn and _fits(C, tn, itemsize, buffers, vmem_limit):
                try:
                    y = _nchw_to_nhwc_dense(x3, tn, vmem_limit=vmem_limit,
                                            buffers=buffers)
                    return y.reshape(B, H, W, C)
                except Exception:
                    pass                          # fall through to plain kernel
        tm, tn = _pick_tiles(C, L, itemsize, tile_target, uneven_ok)
        if l_tile is not None:
            tn = int(l_tile)
        if (not _fits(tm, tn, itemsize, 2, vmem_limit)
                or (not uneven_ok and (C % tm or L % tn))):
            return jnp.transpose(x, dims)         # never compile an over-budget block
        if buffers and not _fits(tm, tn, itemsize, buffers, vmem_limit):
            buffers = None
        y3 = _plain_transpose_3d(x3, tm, tn, vmem_limit=vmem_limit,
                                 buffers=buffers)
        return y3.reshape(B, H, W, C)

    # dims == (0, 3, 1, 2)                        # NHWC -> NCHW
    B, H, W, C = x.shape
    L = H * W
    x3 = x.reshape(B, L, C)
    if (l_tile is None and itemsize == 4 and C < 128 and L % 128 == 0
            and _supports_dense_bwd()):
        tm = _pick_dense_tn(L, C, itemsize, tile_target, uneven_ok)
        if tm and _fits(C, tm, itemsize, buffers, vmem_limit):
            try:
                y3 = _nhwc_to_nchw_dense(x3, tm, vmem_limit=vmem_limit,
                                         buffers=buffers)
                return y3.reshape(B, C, H, W)
            except Exception:
                pass
    tm, tn = _pick_tiles(L, C, itemsize, tile_target, uneven_ok)
    if l_tile is not None:
        tm = int(l_tile)
    if (not _fits(tm, tn, itemsize, 2, vmem_limit)
            or (not uneven_ok and (L % tm or C % tn))):
        return jnp.transpose(x, dims)
    if buffers and not _fits(tm, tn, itemsize, buffers, vmem_limit):
        buffers = None
    y3 = _plain_transpose_3d(x3, tm, tn, vmem_limit=vmem_limit, buffers=buffers)
    return y3.reshape(B, C, H, W)


# --------------------------------------------------------------------------- #
if __name__ == "__main__":
    key = jax.random.PRNGKey(0)

    # 1) NCHW -> NHWC at the module's typical small shape (lane-dense path
    #    when supported, plain tiled transpose otherwise).
    x = jax.random.normal(key, (2, 4, 16, 16), dtype=jnp.float32)
    out = jax.block_until_ready(permute_pallas(x, (0, 2, 3, 1), force_pallas=True))
    ref = jnp.transpose(x, (0, 2, 3, 1))
    assert out.shape == ref.shape and out.dtype == ref.dtype
    assert jnp.array_equal(out, ref), "mismatch vs reference permute (0,2,3,1)"

    # 2) Multi-tile plain path (explicit 128-wide spatial tiles).
    x2 = jax.random.normal(key, (2, 8, 16, 16), dtype=jnp.float32)
    out2 = jax.block_until_ready(
        permute_pallas(x2, (0, 2, 3, 1), force_pallas=True, l_tile=128))
    assert jnp.array_equal(out2, jnp.transpose(x2, (0, 2, 3, 1))), \
        "mismatch vs reference permute (tiled path)"

    # 3) NHWC -> NCHW (reverse direction; lane-dense read path when supported).
    x3 = jax.random.normal(key, (2, 16, 16, 8), dtype=jnp.float32)
    out3 = jax.block_until_ready(
        permute_pallas(x3, (0, 3, 1, 2), force_pallas=True))
    assert jnp.array_equal(out3, jnp.transpose(x3, (0, 3, 1, 2))), \
        "mismatch vs reference permute (0,3,1,2)"

    # 4) Spatial extent not a multiple of 128 (masked-edge tiling when
    #    supported, full-block / XLA fallback otherwise).
    x4 = jax.random.normal(key, (1, 8, 20, 16), dtype=jnp.float32)
    out4 = jax.block_until_ready(
        permute_pallas(x4, (0, 2, 3, 1), force_pallas=True))
    assert jnp.array_equal(out4, jnp.transpose(x4, (0, 2, 3, 1))), \
        "mismatch vs reference permute (uneven spatial extent)"

    # 5) General permutation -> XLA transpose fallback (no Pallas path).
    x5 = jax.random.normal(key, (2, 4, 8, 8), dtype=jnp.float32)
    out5 = jax.block_until_ready(permute_pallas(x5, (1, 0, 2, 3)))
    assert jnp.array_equal(out5, jnp.transpose(x5, (1, 0, 2, 3))), \
        "mismatch vs reference permute (general dims)"

    print("KERNEL_OK")
</pallas_src>

<mosaic_0001>
module attributes {stable_mosaic.version = 11 : i64} {
  func.func @_transpose_kernel(%arg0: i32, %arg1: i32, %arg2: i32, %arg3: memref<1x8x256xf32, #tpu.memory_space<vmem>>, %arg4: memref<1x256x8xf32, #tpu.memory_space<vmem>>) attributes {dimension_semantics = [#tpu.dimension_semantics<parallel>, #tpu.dimension_semantics<parallel>, #tpu.dimension_semantics<parallel>], iteration_bounds = array<i64: 1, 1, 2>, scalar_prefetch = 0 : i64, scratch_operands = 0 : i64, tpu.core_type = #tpu.core_type<tc>, window_params = [{transform_indices = @transform_0, window_bounds = array<i64: 1, 8, 256>}, {transform_indices = @transform_1, window_bounds = array<i64: 1, 256, 8>}]} {
    %c0 = arith.constant 0 : index
    %c0_0 = arith.constant 0 : index
    %c0_1 = arith.constant 0 : index
    %0 = vector.load %arg3[%c0, %c0_0, %c0_1] : memref<1x8x256xf32, #tpu.memory_space<vmem>>, vector<1x8x256xf32>
    %1 = vector.shape_cast %0 : vector<1x8x256xf32> to vector<8x256xf32>
    %2 = tpu.transpose %1, [1, 0] : vector<8x256xf32> -> vector<256x8xf32>
    %c0_2 = arith.constant 0 : index
    %c0_3 = arith.constant 0 : index
    %c0_4 = arith.constant 0 : index
    %3 = vector.load %arg4[%c0_2, %c0_3, %c0_4] : memref<1x256x8xf32, #tpu.memory_space<vmem>>, vector<1x256x8xf32>
    %4 = vector.shape_cast %3 : vector<1x256x8xf32> to vector<256x8xf32>
    %5 = vector.shape_cast %2 : vector<256x8xf32> to vector<1x256x8xf32>
    tpu.vector_store %arg4[%c0_2, %c0_3, %c0_4], %5 {strides = array<i32>} : memref<1x256x8xf32, #tpu.memory_space<vmem>>, vector<1x256x8xf32>,
    return
  }
  func.func @transform_0(%arg0: i32, %arg1: i32, %arg2: i32) -> (i32, i32, i32) {
    %c0_i32 = arith.constant 0 : i32
    return %arg0, %arg1, %arg2 : i32, i32, i32
  }
  func.func @transform_1(%arg0: i32, %arg1: i32, %arg2: i32) -> (i32, i32, i32) {
    %c0_i32 = arith.constant 0 : i32
    return %arg0, %arg2, %arg1 : i32, i32, i32
  }
}

module attributes {stable_mosaic.version = 11 : i64} {
  func.func @_nchw_to_nhwc_dense_kernel(%arg0: i32, %arg1: i32, %arg2: memref<1x4x256xf32, #tpu.memory_space<vmem>>, %arg3: memref<1x2x512xf32, #tpu.memory_space<vmem>>) attributes {dimension_semantics = [#tpu.dimension_semantics<parallel>, #tpu.dimension_semantics<parallel>], iteration_bounds = array<i64: 1, 1>, scalar_prefetch = 0 : i64, scratch_operands = 0 : i64, tpu.core_type = #tpu.core_type<tc>, window_params = [{transform_indices = @transform_0, window_bounds = array<i64: 1, 4, 256>}, {transform_indices = @transform_1, window_bounds = array<i64: 1, 2, 512>}]} {
    %c0 = arith.constant 0 : index
    %c0_0 = arith.constant 0 : index
    %c0_1 = arith.constant 0 : index
    %0 = vector.load %arg2[%c0, %c0_0, %c0_1] : memref<1x4x256xf32, #tpu.memory_space<vmem>>, vector<1x4x256xf32>
    %1 = vector.shape_cast %0 : vector<1x4x256xf32> to vector<4x256xf32>
    %2 = tpu.transpose %1, [1, 0] : vector<4x256xf32> -> vector<256x4xf32>
    %3 = vector.shape_cast %2 : vector<256x4xf32> to vector<2x512xf32>
    %c0_2 = arith.constant 0 : index
    %c0_3 = arith.constant 0 : index
    %c0_4 = arith.constant 0 : index
    %4 = vector.load %arg3[%c0_2, %c0_3, %c0_4] : memref<1x2x512xf32, #tpu.memory_space<vmem>>, vector<1x2x512xf32>
    %5 = vector.shape_cast %4 : vector<1x2x512xf32> to vector<2x512xf32>
    %6 = vector.shape_cast %3 : vector<2x512xf32> to vector<1x2x512xf32>
    tpu.vector_store %arg3[%c0_2, %c0_3, %c0_4], %6 {strides = array<i32>} : memref<1x2x512xf32, #tpu.memory_space<vmem>>, vector<1x2x512xf32>,
    return
  }
  func.func @transform_0(%arg0: i32, %arg1: i32) -> (i32, i32, i32) {
    %c0_i32 = arith.constant 0 : i32
    %c0_i32_0 = arith.constant 0 : i32
    return %arg0, %c0_i32, %arg1 : i32, i32, i32
  }
  func.func @transform_1(%arg0: i32, %arg1: i32) -> (i32, i32, i32) {
    %c0_i32 = arith.constant 0 : i32
    %c0_i32_0 = arith.constant 0 : i32
    return %arg0, %arg1, %c0_i32 : i32, i32, i32
  }
}

module attributes {stable_mosaic.version = 11 : i64} {
  func.func @_transpose_kernel(%arg0: i32, %arg1: i32, %arg2: i32, %arg3: memref<1x4x256xf32, #tpu.memory_space<vmem>>, %arg4: memref<1x256x4xf32, #tpu.memory_space<vmem>>) attributes {dimension_semantics = [#tpu.dimension_semantics<parallel>, #tpu.dimension_semantics<parallel>, #tpu.dimension_semantics<parallel>], iteration_bounds = array<i64: 2, 1, 1>, scalar_prefetch = 0 : i64, scratch_operands = 0 : i64, tpu.core_type = #tpu.core_type<tc>, window_params = [{transform_indices = @transform_0, window_bounds = array<i64: 1, 4, 256>}, {transform_indices = @transform_1, window_bounds = array<i64: 1, 256, 4>}]} {
    %c0 = arith.constant 0 : index
    %c0_0 = arith.constant 0 : index
    %c0_1 = arith.constant 0 : index
    %0 = vector.load %arg3[%c0, %c0_0, %c0_1] : memref<1x4x256xf32, #tpu.memory_space<vmem>>, vector<1x4x256xf32>
    %1 = vector.shape_cast %0 : vector<1x4x256xf32> to vector<4x256xf32>
    %2 = tpu.transpose %1, [1, 0] : vector<4x256xf32> -> vector<256x4xf32>
    %c0_2 = arith.constant 0 : index
    %c0_3 = arith.constant 0 : index
    %c0_4 = arith.constant 0 : index
    %3 = vector.load %arg4[%c0_2, %c0_3, %c0_4] : memref<1x256x4xf32, #tpu.memory_space<vmem>>, vector<1x256x4xf32>
    %4 = vector.shape_cast %3 : vector<1x256x4xf32> to vector<256x4xf32>
    %5 = vector.shape_cast %2 : vector<256x4xf32> to vector<1x256x4xf32>
    tpu.vector_store %arg4[%c0_2, %c0_3, %c0_4], %5 {strides = array<i32>} : memref<1x256x4xf32, #tpu.memory_space<vmem>>, vector<1x256x4xf32>,
    return
  }
  func.func @transform_0(%arg0: i32, %arg1: i32, %arg2: i32) -> (i32, i32, i32) {
    %c0_i32 = arith.constant 0 : i32
    return %arg0, %arg1, %arg2 : i32, i32, i32
  }
  func.func @transform_1(%arg0: i32, %arg1: i32, %arg2: i32) -> (i32, i32, i32) {
    %c0_i32 = arith.constant 0 : i32
    return %arg0, %arg2, %arg1 : i32, i32, i32
  }
}

</mosaic_0001>

<llo_original>
// kernel: tpu_custom_call.1
$region0: #{tpu_custom_call.1}
  #allocation0 [shape = 'u32[]', space=smem, size = 0x4, offset = 0x4, fixed_abs, tag = 'smem constant byte address 0x4 - core index']
  #allocation1 [shape = 'u32[144,128]{1,0:T(1,128)}', space=vmem, size = 0x12000, scoped, tag = 'internal scratch']
  %s0 = inlined_call_operand.hbm [shape: f32[1,8,320], index: 0, kind: input, shape index: {}]
  %s1 = inlined_call_operand.vmem [shape: f32[1,320,8], index: 1, kind: output, shape index: {}]
  %s2 = sld [smem:[#allocation0]]
  $region89: #{tpu_custom_call.1} parent=0
    _
  %s4 = ssub.s32 1, %s2
  %s5 = scalar_select 0, %s4, %s2
  $region1: #{tpu_custom_call.1} parent=0
    #allocation2 [shape = 'u8[16384]{0}', space=vmem, size = 0x4000, scoped, tag = 'input window, operand 0']
    #allocation3 [shape = 's32[2]{0}', space=sflag, size = 0x8, scoped, tag = 'scoped memory for tpu_custom_call.1']
    #allocation4 [shape = 'u8[262144]{0}', space=vmem, size = 0x40000, scoped, tag = 'output window, operand 0']
    %6 = vsyncpa [#allocation3], 0
    %s7 = scalar_lea.sflag [#allocation3], 1
    %8 = vsyncpa %s7, 0
    loop: start=0, step=1, limit=4
    $region2: #{tpu_custom_call.1} parent=1 // loop_pre_header
      _
    $region3: #{tpu_custom_call.1} parent=1 // loop_header
      %s10 = sphi 0, %s14
      %p11 = scmp.ge.s32.totalorder %s10, 4
      %s17 = sphi 0, %s36
      %s18 = sphi 0, %s32
      %s19 = sphi 0, %s28
      %s20 = sphi 0, %s17
      %s21 = sphi 0, %s18
      %s22 = sphi 0, %s19
      %s23 = sphi 0, %s20
      %s24 = sphi 0, %s21
      %s25 = sphi 0, %s22
      %s43 = sphi 0, %s45
      %s46 = sphi 0, %s43
      %s47 = sphi 0, %s46
      %s63 = sphi 0, %s47
      %s73 = sphi 0, %s75
      %s76 = sphi 0, %s73
      %s77 = sphi 0, %s76
      %s93 = sphi 0, %s77
    $region4: #{tpu_custom_call.1} parent=1 // loop_header_branch
      %13 = sbr.rel (%p11) target = $region8
    $region5: #{tpu_custom_call.1} parent=1 // loop_body
      %s15 = ssub.s32 %s10, 1
      %s16 = ssub.s32 %s10, 2
      %s26 = sadd.s32 1, %s19
      %p27 = scmp.ge.s32.totalorder %s26, 2
      %s28 = scalar_select %p27, 0, %s26
      %s29 = sadd.s32 1, %s18
      %s30 = scalar_select %p27, %s29, %s18
      %p31 = scmp.ge.s32.totalorder %s30, 1
      %s32 = scalar_select %p31, 0, %s30
      %s33 = sadd.s32 1, %s17
      %s34 = scalar_select %p31, %s33, %s17
      %p35 = scmp.ge.s32.totalorder %s34, 1
      %s36 = scalar_select %p35, 0, %s34
      %s37 = ssub.s32 %s17, %s36
      %s38 = ssub.s32 %s18, %s32
      %s39 = sor.u32 %s37, %s38
      %s40 = ssub.s32 %s19, %s28
      %s41 = sor.u32 %s39, %s40
      %p42 = scmp.eq.s32.totalorder %s41, 0
      %s44 = sadd.s32 %s43, 1
      %s45 = scalar_select %p42, %s43, %s44
      %p48 = pneg %p42
      %p49 = scmp.eq.s32.totalorder %s10, 1
      %p50 = por %p48, %p49
      %p51 = scmp.ne.s32.totalorder %s43, %s46
      %p52 = scmp.eq.s32.totalorder %s10, 0
      %p53 = por %p51, %p52
      %p54 = scmp.ne.s32.totalorder %s43, %s46
      %p55 = scmp.eq.s32.totalorder %s15, 1
      %p56 = por %p54, %p55
      %p57 = scmp.ne.s32.totalorder %s46, %s47
      %p58 = scmp.eq.s32.totalorder %s15, 0
      %p59 = por %p57, %p58
      %p60 = scmp.ne.s32.totalorder %s46, %s47
      %p61 = scmp.eq.s32.totalorder %s16, 1
      %p62 = por %p60, %p61
      %p64 = scmp.ne.s32.totalorder %s47, %s63
      %p65 = scmp.eq.s32.totalorder %s16, 0
      %p66 = por %p64, %p65
      %s67 = ssub.s32 %s17, %s36
      %s68 = ssub.s32 %s19, %s28
      %s69 = sor.u32 %s67, %s68
      %s70 = ssub.s32 %s18, %s32
      %s71 = sor.u32 %s69, %s70
      %p72 = scmp.eq.s32.totalorder %s71, 0
      %s74 = sadd.s32 %s73, 1
      %s75 = scalar_select %p72, %s73, %s74
      %p78 = pneg %p72
      %p79 = scmp.eq.s32.totalorder %s10, 1
      %p80 = por %p78, %p79
      %p81 = scmp.ne.s32.totalorder %s73, %s76
      %p82 = scmp.eq.s32.totalorder %s10, 0
      %p83 = por %p81, %p82
      %p84 = scmp.ne.s32.totalorder %s73, %s76
      %p85 = scmp.eq.s32.totalorder %s15, 1
      %p86 = por %p84, %p85
      %p87 = scmp.ne.s32.totalorder %s76, %s77
      %p88 = scmp.eq.s32.totalorder %s15, 0
      %p89 = por %p87, %p88
      %p90 = scmp.ne.s32.totalorder %s76, %s77
      %p91 = scmp.eq.s32.totalorder %s16, 1
      %p92 = por %p90, %p91
      %p94 = scmp.ne.s32.totalorder %s77, %s93
      %p95 = scmp.eq.s32.totalorder %s16, 0
      %p96 = por %p94, %p95
      %p97 = scmp.le.s32.totalorder 1, %s10
      %p98 = scmp.lt.s32.totalorder %s10, 3
      %p99 = pnand %p97, %p98
      %p100 = pneg %p99
      // Predicated region
      $region9: #{tpu_custom_call.1} parent=5 // pred_check
        _
      $region10: #{tpu_custom_call.1} parent=5 // pred_check_branch
        %102 = sbr.rel (%p99) target = $region12
      $region11: #{tpu_custom_call.1} parent=5 // pred_region
        %s103 = ssub.s32 %s10, 1
      $region12: #{tpu_custom_call.1} parent=5 // pred_fallthru
        _
      %p104 = scmp.lt.s32.totalorder %s10, 2
      // Predicated region
      $region13: #{tpu_custom_call.1} parent=5 // pred_check
        %p105 = pneg %p104
      $region14: #{tpu_custom_call.1} parent=5 // pred_check_branch
        %107 = sbr.rel (%p105) target = $region16
      $region15: #{tpu_custom_call.1} parent=5 // pred_region
        // Predicated region
        $region17: #{tpu_custom_call.1} parent=15 // pred_check
          %p108 = pneg %p53
        $region18: #{tpu_custom_call.1} parent=15 // pred_check_branch
          %110 = sbr.rel (%p108) target = $region20
        $region19: #{tpu_custom_call.1} parent=15 // pred_region
          %s111 = sand.u32 %s43, 1
          %s112 = scalar_lea.sflag [#allocation3], %s111
          %s113 = sand.u32 %s43, 1
          %s114 = smul.addr %s113, 16
          %s115 = scalar_lea.vmem [#allocation2], %s114
          %s116 = smul.u32 2, %s19
          %s117 = ssub.s32 3, %s116
          %p118 = scmp.lt.s32.totalorder %s117, 2
          %s119 = scalar_select %p118, %s117, 2
          %s120 = smul.u32 128, %s119
          %s122 = ssub.s32 256, %s120
          %123 = vsyncadd %s112, %s122
          %p124 = scmp.ne.s32.totalorder 0, %s120
          %s125 = smul.addr %s18, 3
          %s126 = sadd.s32 %s116, %s125
          %s127 = smul.addr %s17, 3
          %s128 = sadd.s32 %s126, %s127
          %s129 = smul.addr %s128, 128
          %s130 = scalar_lea.hbm %s0, %s129
          %s131 = smul.u32 %s119, 8
          %s132 = sshll.u32 %s131, 4
          %s133 = sshll.u32 %s115, 4
          %s134 = int_to_ptr.vmem [resolvable:$true] %s133
          %136 = dma.hbm_to_vmem [thread:$0]  (%p124), %s130, %s132, %s134, %s112
        $region20: #{tpu_custom_call.1} parent=15 // pred_fallthru
          _
      $region16: #{tpu_custom_call.1} parent=5 // pred_fallthru
        _
      %p137 = scmp.le.s32.totalorder 1, %s10
      %p138 = scmp.lt.s32.totalorder %s10, 3
      %p139 = pnand %p137, %p138
      %p140 = pneg %p139
      // Predicated region
      $region21: #{tpu_custom_call.1} parent=5 // pred_check
        _
      $region22: #{tpu_custom_call.1} parent=5 // pred_check_branch
        %142 = sbr.rel (%p139) target = $region24
      $region23: #{tpu_custom_call.1} parent=5 // pred_region
        %s143 = ssub.s32 %s10, 1
        %s144 = sand.u32 %s46, 1
        %s145 = scalar_lea.sflag [#allocation3], %s144
        %s146 = sand.u32 %s46, 1
        %s147 = smul.addr %s146, 16
        %s148 = scalar_lea.vmem [#allocation2], %s147
        // Predicated region
        $region25: #{tpu_custom_call.1} parent=23 // pred_check
          %p149 = pneg %p59
        $region26: #{tpu_custom_call.1} parent=23 // pred_check_branch
          %151 = sbr.rel (%p149) target = $region28
        $region27: #{tpu_custom_call.1} parent=23 // pred_region
          %152 = dma.done %s145, 256
        $region28: #{tpu_custom_call.1} parent=23 // pred_fallthru
          _
        %s153 = sand.u32 %s46, 1
        %s154 = scalar_lea.sflag [#allocation3], %s153
        %s155 = sand.u32 %s46, 1
        %s156 = smul.addr %s155, 16
        %s157 = scalar_lea.vmem [#allocation2], %s156
        %p158 = pneg %p59
        %p159 = pneg %p56
        %p160 = pneg %p89
        %p161 = pneg %p86
        %s162 = sand.u32 %s76, 1
        %s163 = sand.u32 %s76, 1
        %s164 = smul.addr %s163, 256
        %s165 = scalar_lea.vmem [#allocation4], %s164
        %s166 = smul.u32 2, %s22
        %s167 = ssub.s32 3, %s166
        %p168 = scmp.lt.s32.totalorder %s167, 2
        %s169 = scalar_select %p168, %s167, 2
        %s170 = smul.u32 128, %s169
        %s171 = smul.u32 32, %s22
        %s172 = ssub.s32 40, %s171
        %p173 = scmp.lt.s32.totalorder %s172, 32
        %s174 = scalar_select %p173, %s172, 32
        %s175 = smul.u32 128, %s174
        %v176 = vld [vmem:[%s148] sm:$0xff]
        %v177 = vld [vmem:[%s148 + $0x8] sm:$0xff]
        %178 = vxpose.xlu0.b32.start [1/16] %v176, 128
        %179 = vxpose.xlu0.b32.cont [2/16] 0.0, 128
        %180 = vxpose.xlu0.b32.cont [3/16] 0.0, 128
        %181 = vxpose.xlu0.b32.cont [4/16] 0.0, 128
        %182 = vxpose.xlu0.b32.cont [5/16] 0.0, 128
        %183 = vxpose.xlu0.b32.cont [6/16] 0.0, 128
        %184 = vxpose.xlu0.b32.cont [7/16] 0.0, 128
        %185 = vxpose.xlu0.b32.cont [8/16] 0.0, 128
        %186 = vxpose.xlu0.b32.cont [9/16] 0.0, 128
        %187 = vxpose.xlu0.b32.cont [10/16] 0.0, 128
        %188 = vxpose.xlu0.b32.cont [11/16] 0.0, 128
        %189 = vxpose.xlu0.b32.cont [12/16] 0.0, 128
        %190 = vxpose.xlu0.b32.cont [13/16] 0.0, 128
        %191 = vxpose.xlu0.b32.cont [14/16] 0.0, 128
        %192 = vxpose.xlu0.b32.cont [15/16] 0.0, 128
        %193 = vxpose.xlu0.b32.end [16/16] 0.0, 128
        %v194 = vpop.trf.xlu0
        %v195 = vpop.trf.xlu0
        %v196 = vpop.trf.xlu0
        %v197 = vpop.trf.xlu0
        %v198 = vpop.trf.xlu0
        %v199 = vpop.trf.xlu0
        %v200 = vpop.trf.xlu0
        %v201 = vpop.trf.xlu0
        %v202 = vpop.trf.xlu0
        %v203 = vpop.trf.xlu0
        %v204 = vpop.trf.xlu0
        %v205 = vpop.trf.xlu0
        %v206 = vpop.trf.xlu0
        %v207 = vpop.trf.xlu0
        %v208 = vpop.trf.xlu0
        %v209 = vpop.trf.xlu0
        %210 = vxpose.xlu0.b32.start [1/16] %v177, 128
        %211 = vxpose.xlu0.b32.cont [2/16] 0.0, 128
        %212 = vxpose.xlu0.b32.cont [3/16] 0.0, 128
        %213 = vxpose.xlu0.b32.cont [4/16] 0.0, 128
        %214 = vxpose.xlu0.b32.cont [5/16] 0.0, 128
        %215 = vxpose.xlu0.b32.cont [6/16] 0.0, 128
        %216 = vxpose.xlu0.b32.cont [7/16] 0.0, 128
        %217 = vxpose.xlu0.b32.cont [8/16] 0.0, 128
        %218 = vxpose.xlu0.b32.cont [9/16] 0.0, 128
        %219 = vxpose.xlu0.b32.cont [10/16] 0.0, 128
        %220 = vxpose.xlu0.b32.cont [11/16] 0.0, 128
        %221 = vxpose.xlu0.b32.cont [12/16] 0.0, 128
        %222 = vxpose.xlu0.b32.cont [13/16] 0.0, 128
        %223 = vxpose.xlu0.b32.cont [14/16] 0.0, 128
        %224 = vxpose.xlu0.b32.cont [15/16] 0.0, 128
        %225 = vxpose.xlu0.b32.end [16/16] 0.0, 128
        %v226 = vpop.trf.xlu0
        %v227 = vpop.trf.xlu0
        %v228 = vpop.trf.xlu0
        %v229 = vpop.trf.xlu0
        %v230 = vpop.trf.xlu0
        %v231 = vpop.trf.xlu0
        %v232 = vpop.trf.xlu0
        %v233 = vpop.trf.xlu0
        %v234 = vpop.trf.xlu0
        %v235 = vpop.trf.xlu0
        %v236 = vpop.trf.xlu0
        %v237 = vpop.trf.xlu0
        %v238 = vpop.trf.xlu0
        %v239 = vpop.trf.xlu0
        %v240 = vpop.trf.xlu0
        %v241 = vpop.trf.xlu0
        %vm242 = vcmask 64512
        %243 = vst.msk [vmem:[%s165] sm:$0xff] %vm242, %v194
        %244 = vst.msk [vmem:[%s165 + $0x8] sm:$0xff] %vm242, %v195
        %245 = vst.msk [vmem:[%s165 + $0x10] sm:$0xff] %vm242, %v196
        %246 = vst.msk [vmem:[%s165 + $0x18] sm:$0xff] %vm242, %v197
        %247 = vst.msk [vmem:[%s165 + $0x20] sm:$0xff] %vm242, %v198
        %248 = vst.msk [vmem:[%s165 + $0x28] sm:$0xff] %vm242, %v199
        %249 = vst.msk [vmem:[%s165 + $0x30] sm:$0xff] %vm242, %v200
        %250 = vst.msk [vmem:[%s165 + $0x38] sm:$0xff] %vm242, %v201
        %251 = vst.msk [vmem:[%s165 + $0x40] sm:$0xff] %vm242, %v202
        %252 = vst.msk [vmem:[%s165 + $0x48] sm:$0xff] %vm242, %v203
        %253 = vst.msk [vmem:[%s165 + $0x50] sm:$0xff] %vm242, %v204
        %254 = vst.msk [vmem:[%s165 + $0x58] sm:$0xff] %vm242, %v205
        %255 = vst.msk [vmem:[%s165 + $0x60] sm:$0xff] %vm242, %v206
        %256 = vst.msk [vmem:[%s165 + $0x68] sm:$0xff] %vm242, %v207
        %257 = vst.msk [vmem:[%s165 + $0x70] sm:$0xff] %vm242, %v208
        %258 = vst.msk [vmem:[%s165 + $0x78] sm:$0xff] %vm242, %v209
        %259 = vst.msk [vmem:[%s165 + $0x80] sm:$0xff] %vm242, %v226
        %260 = vst.msk [vmem:[%s165 + $0x88] sm:$0xff] %vm242, %v227
        %261 = vst.msk [vmem:[%s165 + $0x90] sm:$0xff] %vm242, %v228
        %262 = vst.msk [vmem:[%s165 + $0x98] sm:$0xff] %vm242, %v229
        %263 = vst.msk [vmem:[%s165 + $0xa0] sm:$0xff] %vm242, %v230
        %264 = vst.msk [vmem:[%s165 + $0xa8] sm:$0xff] %vm242, %v231
        %265 = vst.msk [vmem:[%s165 + $0xb0] sm:$0xff] %vm242, %v232
        %266 = vst.msk [vmem:[%s165 + $0xb8] sm:$0xff] %vm242, %v233
        %267 = vst.msk [vmem:[%s165 + $0xc0] sm:$0xff] %vm242, %v234
        %268 = vst.msk [vmem:[%s165 + $0xc8] sm:$0xff] %vm242, %v235
        %269 = vst.msk [vmem:[%s165 + $0xd0] sm:$0xff] %vm242, %v236
        %270 = vst.msk [vmem:[%s165 + $0xd8] sm:$0xff] %vm242, %v237
        %271 = vst.msk [vmem:[%s165 + $0xe0] sm:$0xff] %vm242, %v238
        %272 = vst.msk [vmem:[%s165 + $0xe8] sm:$0xff] %vm242, %v239
        %273 = vst.msk [vmem:[%s165 + $0xf0] sm:$0xff] %vm242, %v240
        %274 = vst.msk [vmem:[%s165 + $0xf8] sm:$0xff] %vm242, %v241
        %s275 = sand.u32 %s76, 1
        %s276 = sand.u32 %s76, 1
        %s277 = smul.addr %s276, 256
        %s278 = scalar_lea.vmem [#allocation4], %s277
        // Predicated region
        $region29: #{tpu_custom_call.1} parent=23 // pred_check
          %p279 = pneg %p86
        $region30: #{tpu_custom_call.1} parent=23 // pred_check_branch
          %281 = sbr.rel (%p279) target = $region32
        $region31: #{tpu_custom_call.1} parent=23 // pred_region
          %s282 = smul.u32 32, %s22
          %s283 = ssub.s32 40, %s282
          %p284 = scmp.lt.s32.totalorder %s283, 32
          %s285 = scalar_select %p284, %s283, 32
          %s286 = smul.u32 128, %s285
          %p287 = scmp.ne.s32.totalorder 0, %s286
          %s288 = sadd.s32 %s21, %s282
          %s289 = smul.addr %s20, 40
          %s290 = sadd.s32 %s288, %s289
          %s291 = smul.addr %s290, 8
          %s292 = scalar_lea.vmem %s1, %s291
          // Predicated region
          $region33: #{tpu_custom_call.1} parent=31 // pred_check
            %p293 = pneg %p287
          $region34: #{tpu_custom_call.1} parent=31 // pred_check_branch
            %295 = sbr.rel (%p293) target = $region36
          $region35: #{tpu_custom_call.1} parent=31 // pred_region
            // Predicated region
            $region37: #{tpu_custom_call.1} parent=35 // pred_check
              _
            $region38: #{tpu_custom_call.1} parent=35 // pred_check_branch
              %297 = sbr.rel (0) target = $region40
            $region39: #{tpu_custom_call.1} parent=35 // pred_region
              // Predicated region
              $region59: #{tpu_custom_call.1} parent=39 // pred_check
                _
              $region60: #{tpu_custom_call.1} parent=39 // pred_check_branch
                %408 = sbr.rel (0) target = $region62
              $region61: #{tpu_custom_call.1} parent=39 // pred_region
                %s409 = sshrl.u32 %s285, 5
                // While loop
                $region63: #{tpu_custom_call.1} parent=61 // loop_pre_header
                  _
                $region64: #{tpu_custom_call.1} parent=61 // loop_header
                  %s411 = sphi 0, %s413
                  %p412 = scmp.ge.s32.totalorder %s411, %s409
                  %s416 = sphi 0, %s485
                  %s417 = sphi %s278, %s488
                  %s418 = sphi %s292, %s489
                $region65: #{tpu_custom_call.1} parent=61 // loop_header_branch
                  %415 = sbr.rel (%p412) target = $region69
                $region66: #{tpu_custom_call.1} parent=61 // loop_body
                  %v419 = vld [vmem:[%s417] sm:$0xff]
                  %420 = vst [vmem:[%s418] sm:$0xff] %v419
                  %v421 = vld [vmem:[%s417 + $0x8] sm:$0xff]
                  %422 = vst [vmem:[%s418 + $0x8] sm:$0xff] %v421
                  %v423 = vld [vmem:[%s417 + $0x10] sm:$0xff]
                  %424 = vst [vmem:[%s418 + $0x10] sm:$0xff] %v423
                  %v425 = vld [vmem:[%s417 + $0x18] sm:$0xff]
                  %426 = vst [vmem:[%s418 + $0x18] sm:$0xff] %v425
                  %v427 = vld [vmem:[%s417 + $0x20] sm:$0xff]
                  %428 = vst [vmem:[%s418 + $0x20] sm:$0xff] %v427
                  %v429 = vld [vmem:[%s417 + $0x28] sm:$0xff]
                  %430 = vst [vmem:[%s418 + $0x28] sm:$0xff] %v429
                  %v431 = vld [vmem:[%s417 + $0x30] sm:$0xff]
                  %432 = vst [vmem:[%s418 + $0x30] sm:$0xff] %v431
                  %v433 = vld [vmem:[%s417 + $0x38] sm:$0xff]
                  %434 = vst [vmem:[%s418 + $0x38] sm:$0xff] %v433
                  %v435 = vld [vmem:[%s417 + $0x40] sm:$0xff]
                  %436 = vst [vmem:[%s418 + $0x40] sm:$0xff] %v435
                  %v437 = vld [vmem:[%s417 + $0x48] sm:$0xff]
                  %438 = vst [vmem:[%s418 + $0x48] sm:$0xff] %v437
                  %v439 = vld [vmem:[%s417 + $0x50] sm:$0xff]
                  %440 = vst [vmem:[%s418 + $0x50] sm:$0xff] %v439
                  %v441 = vld [vmem:[%s417 + $0x58] sm:$0xff]
                  %442 = vst [vmem:[%s418 + $0x58] sm:$0xff] %v441
                  %v443 = vld [vmem:[%s417 + $0x60] sm:$0xff]
                  %444 = vst [vmem:[%s418 + $0x60] sm:$0xff] %v443
                  %v445 = vld [vmem:[%s417 + $0x68] sm:$0xff]
                  %446 = vst [vmem:[%s418 + $0x68] sm:$0xff] %v445
                  %v447 = vld [vmem:[%s417 + $0x70] sm:$0xff]
                  %448 = vst [vmem:[%s418 + $0x70] sm:$0xff] %v447
                  %v449 = vld [vmem:[%s417 + $0x78] sm:$0xff]
                  %450 = vst [vmem:[%s418 + $0x78] sm:$0xff] %v449
                  %v451 = vld [vmem:[%s417 + $0x80] sm:$0xff]
                  %452 = vst [vmem:[%s418 + $0x80] sm:$0xff] %v451
                  %v453 = vld [vmem:[%s417 + $0x88] sm:$0xff]
                  %454 = vst [vmem:[%s418 + $0x88] sm:$0xff] %v453
                  %v455 = vld [vmem:[%s417 + $0x90] sm:$0xff]
                  %456 = vst [vmem:[%s418 + $0x90] sm:$0xff] %v455
                  %v457 = vld [vmem:[%s417 + $0x98] sm:$0xff]
                  %458 = vst [vmem:[%s418 + $0x98] sm:$0xff] %v457
                  %v459 = vld [vmem:[%s417 + $0xa0] sm:$0xff]
                  %460 = vst [vmem:[%s418 + $0xa0] sm:$0xff] %v459
                  %v461 = vld [vmem:[%s417 + $0xa8] sm:$0xff]
                  %462 = vst [vmem:[%s418 + $0xa8] sm:$0xff] %v461
                  %v463 = vld [vmem:[%s417 + $0xb0] sm:$0xff]
                  %464 = vst [vmem:[%s418 + $0xb0] sm:$0xff] %v463
                  %v465 = vld [vmem:[%s417 + $0xb8] sm:$0xff]
                  %466 = vst [vmem:[%s418 + $0xb8] sm:$0xff] %v465
                  %v467 = vld [vmem:[%s417 + $0xc0] sm:$0xff]
                  %468 = vst [vmem:[%s418 + $0xc0] sm:$0xff] %v467
                  %v469 = vld [vmem:[%s417 + $0xc8] sm:$0xff]
                  %470 = vst [vmem:[%s418 + $0xc8] sm:$0xff] %v469
                  %v471 = vld [vmem:[%s417 + $0xd0] sm:$0xff]
                  %472 = vst [vmem:[%s418 + $0xd0] sm:$0xff] %v471
                  %v473 = vld [vmem:[%s417 + $0xd8] sm:$0xff]
                  %474 = vst [vmem:[%s418 + $0xd8] sm:$0xff] %v473
                  %v475 = vld [vmem:[%s417 + $0xe0] sm:$0xff]
                  %476 = vst [vmem:[%s418 + $0xe0] sm:$0xff] %v475
                  %v477 = vld [vmem:[%s417 + $0xe8] sm:$0xff]
                  %478 = vst [vmem:[%s418 + $0xe8] sm:$0xff] %v477
                  %v479 = vld [vmem:[%s417 + $0xf0] sm:$0xff]
                  %480 = vst [vmem:[%s418 + $0xf0] sm:$0xff] %v479
                  %v481 = vld [vmem:[%s417 + $0xf8] sm:$0xff]
                  %482 = vst [vmem:[%s418 + $0xf8] sm:$0xff] %v481
                  %s483 = sadd.s32 1, %s416
                  %p484 = scmp.ge.s32.totalorder %s483, %s409
                  %s485 = scalar_select %p484, 0, %s483
                  %s486 = smul.u32 %s485, 256
                  %s487 = smul.u32 %s485, 256
                  %s488 = scalar_lea.vmem %s278, %s486 [#allocation4]
                  %s489 = scalar_lea.vmem %s292, %s487
                $region67: #{tpu_custom_call.1} parent=61 // loop_footer
                  %s413 = sadd.s32 %s411, 1
                $region68: #{tpu_custom_call.1} parent=61 // loop_footer_branch
                  %410 = sbr.rel target = $region64
                $region69: #{tpu_custom_call.1} parent=61 // loop_exit
                  _
                %s490 = sshrl.u32 %s285, 5
                %s491 = sand.u32 %s285, 31
                %s492 = smul.u32 %s490, 32
                %s493 = smul.u32 8, %s492
                %s494 = scalar_lea.vmem %s278, %s493 [#allocation4]
                %s495 = smul.u32 8, %s492
                %s496 = scalar_lea.vmem %s292, %s495
                // While loop
                $region70: #{tpu_custom_call.1} parent=61 // loop_pre_header
                  _
                $region71: #{tpu_custom_call.1} parent=61 // loop_header
                  %s498 = sphi 0, %s500
                  %p499 = scmp.ge.s32.totalorder %s498, %s491
                  %s503 = sphi 0, %s510
                  %s504 = sphi %s494, %s513
                  %s505 = sphi %s496, %s514
                $region72: #{tpu_custom_call.1} parent=61 // loop_header_branch
                  %502 = sbr.rel (%p499) target = $region76
                $region73: #{tpu_custom_call.1} parent=61 // loop_body
                  %v506 = vld [vmem:[%s504] sm:$0xff]
                  %507 = vst [vmem:[%s505] sm:$0xff] %v506
                  %s508 = sadd.s32 1, %s503
                  %p509 = scmp.ge.s32.totalorder %s508, %s491
                  %s510 = scalar_select %p509, 0, %s508
                  %s511 = smul.u32 %s510, 8
                  %s512 = smul.u32 %s510, 8
                  %s513 = scalar_lea.vmem %s494, %s511 [#allocation4]
                  %s514 = scalar_lea.vmem %s496, %s512
                $region74: #{tpu_custom_call.1} parent=61 // loop_footer
                  %s500 = sadd.s32 %s498, 1
                $region75: #{tpu_custom_call.1} parent=61 // loop_footer_branch
                  %497 = sbr.rel target = $region71
                $region76: #{tpu_custom_call.1} parent=61 // loop_exit
                  _
              $region62: #{tpu_custom_call.1} parent=39 // pred_fallthru
                _
              // Predicated region
              $region77: #{tpu_custom_call.1} parent=39 // pred_check
                _
              $region78: #{tpu_custom_call.1} parent=39 // pred_check_branch
                %516 = sbr.rel target = $region80
              $region79: #{tpu_custom_call.1} parent=39 // pred_region
                _
              $region80: #{tpu_custom_call.1} parent=39 // pred_fallthru
                _
            $region40: #{tpu_custom_call.1} parent=35 // pred_fallthru
              _
            // Predicated region
            $region41: #{tpu_custom_call.1} parent=35 // pred_check
              _
            $region42: #{tpu_custom_call.1} parent=35 // pred_check_branch
              %299 = sbr.rel target = $region44
            $region43: #{tpu_custom_call.1} parent=35 // pred_region
              %s301 = sshrl.u32 %s285, 5
              // While loop
              $region45: #{tpu_custom_call.1} parent=43 // loop_pre_header
                _
              $region46: #{tpu_custom_call.1} parent=43 // loop_header
                %s303 = sphi 0, %s305
                %p304 = scmp.ge.s32.totalorder %s303, %s301
                %s308 = sphi 0, %s377
                %s309 = sphi %s278, %s380
                %s310 = sphi %s292, %s381
              $region47: #{tpu_custom_call.1} parent=43 // loop_header_branch
                %307 = sbr.rel (%p304) target = $region51
              $region48: #{tpu_custom_call.1} parent=43 // loop_body
                %v311 = vld [vmem:[%s309] sm:$0xff]
                %312 = vst [vmem:[%s310] sm:$0xff] %v311
                %v313 = vld [vmem:[%s309 + $0x8] sm:$0xff]
                %314 = vst [vmem:[%s310 + $0x8] sm:$0xff] %v313
                %v315 = vld [vmem:[%s309 + $0x10] sm:$0xff]
                %316 = vst [vmem:[%s310 + $0x10] sm:$0xff] %v315
                %v317 = vld [vmem:[%s309 + $0x18] sm:$0xff]
                %318 = vst [vmem:[%s310 + $0x18] sm:$0xff] %v317
                %v319 = vld [vmem:[%s309 + $0x20] sm:$0xff]
                %320 = vst [vmem:[%s310 + $0x20] sm:$0xff] %v319
                %v321 = vld [vmem:[%s309 + $0x28] sm:$0xff]
                %322 = vst [vmem:[%s310 + $0x28] sm:$0xff] %v321
                %v323 = vld [vmem:[%s309 + $0x30] sm:$0xff]
                %324 = vst [vmem:[%s310 + $0x30] sm:$0xff] %v323
                %v325 = vld [vmem:[%s309 + $0x38] sm:$0xff]
                %326 = vst [vmem:[%s310 + $0x38] sm:$0xff] %v325
                %v327 = vld [vmem:[%s309 + $0x40] sm:$0xff]
                %328 = vst [vmem:[%s310 + $0x40] sm:$0xff] %v327
                %v329 = vld [vmem:[%s309 + $0x48] sm:$0xff]
                %330 = vst [vmem:[%s310 + $0x48] sm:$0xff] %v329
                %v331 = vld [vmem:[%s309 + $0x50] sm:$0xff]
                %332 = vst [vmem:[%s310 + $0x50] sm:$0xff] %v331
                %v333 = vld [vmem:[%s309 + $0x58] sm:$0xff]
                %334 = vst [vmem:[%s310 + $0x58] sm:$0xff] %v333
                %v335 = vld [vmem:[%s309 + $0x60] sm:$0xff]
                %336 = vst [vmem:[%s310 + $0x60] sm:$0xff] %v335
                %v337 = vld [vmem:[%s309 + $0x68] sm:$0xff]
                %338 = vst [vmem:[%s310 + $0x68] sm:$0xff] %v337
                %v339 = vld [vmem:[%s309 + $0x70] sm:$0xff]
                %340 = vst [vmem:[%s310 + $0x70] sm:$0xff] %v339
                %v341 = vld [vmem:[%s309 + $0x78] sm:$0xff]
                %342 = vst [vmem:[%s310 + $0x78] sm:$0xff] %v341
                %v343 = vld [vmem:[%s309 + $0x80] sm:$0xff]
                %344 = vst [vmem:[%s310 + $0x80] sm:$0xff] %v343
                %v345 = vld [vmem:[%s309 + $0x88] sm:$0xff]
                %346 = vst [vmem:[%s310 + $0x88] sm:$0xff] %v345
                %v347 = vld [vmem:[%s309 + $0x90] sm:$0xff]
                %348 = vst [vmem:[%s310 + $0x90] sm:$0xff] %v347
                %v349 = vld [vmem:[%s309 + $0x98] sm:$0xff]
                %350 = vst [vmem:[%s310 + $0x98] sm:$0xff] %v349
                %v351 = vld [vmem:[%s309 + $0xa0] sm:$0xff]
                %352 = vst [vmem:[%s310 + $0xa0] sm:$0xff] %v351
                %v353 = vld [vmem:[%s309 + $0xa8] sm:$0xff]
                %354 = vst [vmem:[%s310 + $0xa8] sm:$0xff] %v353
                %v355 = vld [vmem:[%s309 + $0xb0] sm:$0xff]
                %356 = vst [vmem:[%s310 + $0xb0] sm:$0xff] %v355
                %v357 = vld [vmem:[%s309 + $0xb8] sm:$0xff]
                %358 = vst [vmem:[%s310 + $0xb8] sm:$0xff] %v357
                %v359 = vld [vmem:[%s309 + $0xc0] sm:$0xff]
                %360 = vst [vmem:[%s310 + $0xc0] sm:$0xff] %v359
                %v361 = vld [vmem:[%s309 + $0xc8] sm:$0xff]
                %362 = vst [vmem:[%s310 + $0xc8] sm:$0xff] %v361
                %v363 = vld [vmem:[%s309 + $0xd0] sm:$0xff]
                %364 = vst [vmem:[%s310 + $0xd0] sm:$0xff] %v363
                %v365 = vld [vmem:[%s309 + $0xd8] sm:$0xff]
                %366 = vst [vmem:[%s310 + $0xd8] sm:$0xff] %v365
                %v367 = vld [vmem:[%s309 + $0xe0] sm:$0xff]
                %368 = vst [vmem:[%s310 + $0xe0] sm:$0xff] %v367
                %v369 = vld [vmem:[%s309 + $0xe8] sm:$0xff]
                %370 = vst [vmem:[%s310 + $0xe8] sm:$0xff] %v369
                %v371 = vld [vmem:[%s309 + $0xf0] sm:$0xff]
                %372 = vst [vmem:[%s310 + $0xf0] sm:$0xff] %v371
                %v373 = vld [vmem:[%s309 + $0xf8] sm:$0xff]
                %374 = vst [vmem:[%s310 + $0xf8] sm:$0xff] %v373
                %s375 = sadd.s32 1, %s308
                %p376 = scmp.ge.s32.totalorder %s375, %s301
                %s377 = scalar_select %p376, 0, %s375
                %s378 = smul.u32 %s377, 256
                %s379 = smul.u32 %s377, 256
                %s380 = scalar_lea.vmem %s278, %s378 [#allocation4]
                %s381 = scalar_lea.vmem %s292, %s379
              $region49: #{tpu_custom_call.1} parent=43 // loop_footer
                %s305 = sadd.s32 %s303, 1
              $region50: #{tpu_custom_call.1} parent=43 // loop_footer_branch
                %302 = sbr.rel target = $region46
              $region51: #{tpu_custom_call.1} parent=43 // loop_exit
                _
              %s382 = sshrl.u32 %s285, 5
              %s383 = sand.u32 %s285, 31
              %s384 = smul.u32 %s382, 32
              %s385 = smul.u32 8, %s384
              %s386 = scalar_lea.vmem %s278, %s385 [#allocation4]
              %s387 = smul.u32 8, %s384
              %s388 = scalar_lea.vmem %s292, %s387
              // While loop
              $region52: #{tpu_custom_call.1} parent=43 // loop_pre_header
                _
              $region53: #{tpu_custom_call.1} parent=43 // loop_header
                %s390 = sphi 0, %s392
                %p391 = scmp.ge.s32.totalorder %s390, %s383
                %s395 = sphi 0, %s402
                %s396 = sphi %s386, %s405
                %s397 = sphi %s388, %s406
              $region54: #{tpu_custom_call.1} parent=43 // loop_header_branch
                %394 = sbr.rel (%p391) target = $region58
              $region55: #{tpu_custom_call.1} parent=43 // loop_body
                %v398 = vld [vmem:[%s396] sm:$0xff]
                %399 = vst [vmem:[%s397] sm:$0xff] %v398
                %s400 = sadd.s32 1, %s395
                %p401 = scmp.ge.s32.totalorder %s400, %s383
                %s402 = scalar_select %p401, 0, %s400
                %s403 = smul.u32 %s402, 8
                %s404 = smul.u32 %s402, 8
                %s405 = scalar_lea.vmem %s386, %s403 [#allocation4]
                %s406 = scalar_lea.vmem %s388, %s404
              $region56: #{tpu_custom_call.1} parent=43 // loop_footer
                %s392 = sadd.s32 %s390, 1
              $region57: #{tpu_custom_call.1} parent=43 // loop_footer_branch
                %389 = sbr.rel target = $region53
              $region58: #{tpu_custom_call.1} parent=43 // loop_exit
                _
            $region44: #{tpu_custom_call.1} parent=35 // pred_fallthru
              _
          $region36: #{tpu_custom_call.1} parent=31 // pred_fallthru
            _
          %517 = vnop
        $region32: #{tpu_custom_call.1} parent=23 // pred_fallthru
          _
      $region24: #{tpu_custom_call.1} parent=5 // pred_fallthru
        _
      %p518 = scmp.le.s32.totalorder 2, %s10
      // Predicated region
      $region81: #{tpu_custom_call.1} parent=5 // pred_check
        %p519 = pneg %p518
      $region82: #{tpu_custom_call.1} parent=5 // pred_check_branch
        %521 = sbr.rel (%p519) target = $region84
      $region83: #{tpu_custom_call.1} parent=5 // pred_region
        %s522 = ssub.s32 %s10, 2
        // Predicated region
        $region85: #{tpu_custom_call.1} parent=83 // pred_check
          %p523 = pneg %p92
        $region86: #{tpu_custom_call.1} parent=83 // pred_check_branch
          %525 = sbr.rel (%p523) target = $region88
        $region87: #{tpu_custom_call.1} parent=83 // pred_region
          %s526 = sand.u32 %s77, 1
          %s527 = sand.u32 %s77, 1
          %s528 = smul.addr %s527, 256
          %s529 = scalar_lea.vmem [#allocation4], %s528
        $region88: #{tpu_custom_call.1} parent=83 // pred_fallthru
          _
      $region84: #{tpu_custom_call.1} parent=5 // pred_fallthru
        _
    $region6: #{tpu_custom_call.1} parent=1 // loop_footer
      %s14 = sadd.s32 1, %s10
    $region7: #{tpu_custom_call.1} parent=1 // loop_footer_branch
      %9 = sbr.rel target = $region3
    $region8: #{tpu_custom_call.1} parent=1 // loop_exit
      _
    %530 = vsyncpa [#allocation3], 1
    %s531 = scalar_lea.sflag [#allocation3], 1
    %532 = vsyncpa %s531, 1

// kernel: tpu_custom_call.1
$region0: #{tpu_custom_call.1}
  #allocation0 [shape = 'u32[]', space=smem, size = 0x4, offset = 0x4, fixed_abs, tag = 'smem constant byte address 0x4 - core index']
  #allocation1 [shape = 'u32[144,128]{1,0:T(1,128)}', space=vmem, size = 0x12000, scoped, tag = 'internal scratch']
  %s0 = inlined_call_operand.hbm [shape: f32[2,4,256], index: 0, kind: input, shape index: {}]
  %s1 = inlined_call_operand.vmem [shape: f32[2,256,4], index: 1, kind: output, shape index: {}]
  %s2 = sld [smem:[#allocation0]]
  $region41: #{tpu_custom_call.1} parent=0
    _
  %s4 = ssub.s32 1, %s2
  %s5 = scalar_select 0, %s4, %s2
  $region1: #{tpu_custom_call.1} parent=0
    #allocation2 [shape = 'u8[8192]{0}', space=vmem, size = 0x2000, scoped, tag = 'input window, operand 0']
    #allocation3 [shape = 's32[2]{0}', space=sflag, size = 0x8, scoped, tag = 'scoped memory for tpu_custom_call.1']
    %6 = vsyncpa [#allocation3], 0
    %s7 = scalar_lea.sflag [#allocation3], 1
    %8 = vsyncpa %s7, 0
    loop: start=0, step=1, limit=4
    $region2: #{tpu_custom_call.1} parent=1 // loop_pre_header
      _
    $region3: #{tpu_custom_call.1} parent=1 // loop_header
      %s10 = sphi 0, %s14
      %p11 = scmp.ge.s32.totalorder %s10, 4
      %s17 = sphi 0, %s36
      %s18 = sphi 0, %s32
      %s19 = sphi 0, %s28
      %s20 = sphi 0, %s17
      %s21 = sphi 0, %s18
      %s22 = sphi 0, %s19
      %s23 = sphi 0, %s20
      %s24 = sphi 0, %s21
      %s25 = sphi 0, %s22
      %s43 = sphi 0, %s45
      %s46 = sphi 0, %s43
      %s47 = sphi 0, %s46
      %s63 = sphi 0, %s47
      %s73 = sphi 0, %s75
      %s76 = sphi 0, %s73
      %s77 = sphi 0, %s76
      %s93 = sphi 0, %s77
    $region4: #{tpu_custom_call.1} parent=1 // loop_header_branch
      %13 = sbr.rel (%p11) target = $region8
    $region5: #{tpu_custom_call.1} parent=1 // loop_body
      %s15 = ssub.s32 %s10, 1
      %s16 = ssub.s32 %s10, 2
      %s26 = sadd.s32 1, %s19
      %p27 = scmp.ge.s32.totalorder %s26, 1
      %s28 = scalar_select %p27, 0, %s26
      %s29 = sadd.s32 1, %s18
      %s30 = scalar_select %p27, %s29, %s18
      %p31 = scmp.ge.s32.totalorder %s30, 1
      %s32 = scalar_select %p31, 0, %s30
      %s33 = sadd.s32 1, %s17
      %s34 = scalar_select %p31, %s33, %s17
      %p35 = scmp.ge.s32.totalorder %s34, 2
      %s36 = scalar_select %p35, 0, %s34
      %s37 = ssub.s32 %s17, %s36
      %s38 = ssub.s32 %s18, %s32
      %s39 = sor.u32 %s37, %s38
      %s40 = ssub.s32 %s19, %s28
      %s41 = sor.u32 %s39, %s40
      %p42 = scmp.eq.s32.totalorder %s41, 0
      %s44 = sadd.s32 %s43, 1
      %s45 = scalar_select %p42, %s43, %s44
      %p48 = pneg %p42
      %p49 = scmp.eq.s32.totalorder %s10, 1
      %p50 = por %p48, %p49
      %p51 = scmp.ne.s32.totalorder %s43, %s46
      %p52 = scmp.eq.s32.totalorder %s10, 0
      %p53 = por %p51, %p52
      %p54 = scmp.ne.s32.totalorder %s43, %s46
      %p55 = scmp.eq.s32.totalorder %s15, 1
      %p56 = por %p54, %p55
      %p57 = scmp.ne.s32.totalorder %s46, %s47
      %p58 = scmp.eq.s32.totalorder %s15, 0
      %p59 = por %p57, %p58
      %p60 = scmp.ne.s32.totalorder %s46, %s47
      %p61 = scmp.eq.s32.totalorder %s16, 1
      %p62 = por %p60, %p61
      %p64 = scmp.ne.s32.totalorder %s47, %s63
      %p65 = scmp.eq.s32.totalorder %s16, 0
      %p66 = por %p64, %p65
      %s67 = ssub.s32 %s17, %s36
      %s68 = ssub.s32 %s19, %s28
      %s69 = sor.u32 %s67, %s68
      %s70 = ssub.s32 %s18, %s32
      %s71 = sor.u32 %s69, %s70
      %p72 = scmp.eq.s32.totalorder %s71, 0
      %s74 = sadd.s32 %s73, 1
      %s75 = scalar_select %p72, %s73, %s74
      %p78 = pneg %p72
      %p79 = scmp.eq.s32.totalorder %s10, 1
      %p80 = por %p78, %p79
      %p81 = scmp.ne.s32.totalorder %s73, %s76
      %p82 = scmp.eq.s32.totalorder %s10, 0
      %p83 = por %p81, %p82
      %p84 = scmp.ne.s32.totalorder %s73, %s76
      %p85 = scmp.eq.s32.totalorder %s15, 1
      %p86 = por %p84, %p85
      %p87 = scmp.ne.s32.totalorder %s76, %s77
      %p88 = scmp.eq.s32.totalorder %s15, 0
      %p89 = por %p87, %p88
      %p90 = scmp.ne.s32.totalorder %s76, %s77
      %p91 = scmp.eq.s32.totalorder %s16, 1
      %p92 = por %p90, %p91
      %p94 = scmp.ne.s32.totalorder %s77, %s93
      %p95 = scmp.eq.s32.totalorder %s16, 0
      %p96 = por %p94, %p95
      %p97 = scmp.le.s32.totalorder 1, %s10
      %p98 = scmp.lt.s32.totalorder %s10, 3
      %p99 = pnand %p97, %p98
      %p100 = pneg %p99
      // Predicated region
      $region9: #{tpu_custom_call.1} parent=5 // pred_check
        _
      $region10: #{tpu_custom_call.1} parent=5 // pred_check_branch
        %102 = sbr.rel (%p99) target = $region12
      $region11: #{tpu_custom_call.1} parent=5 // pred_region
        %s103 = ssub.s32 %s10, 1
      $region12: #{tpu_custom_call.1} parent=5 // pred_fallthru
        _
      %p104 = scmp.lt.s32.totalorder %s10, 2
      // Predicated region
      $region13: #{tpu_custom_call.1} parent=5 // pred_check
        %p105 = pneg %p104
      $region14: #{tpu_custom_call.1} parent=5 // pred_check_branch
        %107 = sbr.rel (%p105) target = $region16
      $region15: #{tpu_custom_call.1} parent=5 // pred_region
        // Predicated region
        $region17: #{tpu_custom_call.1} parent=15 // pred_check
          %p108 = pneg %p53
        $region18: #{tpu_custom_call.1} parent=15 // pred_check_branch
          %110 = sbr.rel (%p108) target = $region20
        $region19: #{tpu_custom_call.1} parent=15 // pred_region
          %s111 = sand.u32 %s43, 1
          %s112 = scalar_lea.sflag [#allocation3], %s111
          %s113 = sand.u32 %s43, 1
          %s114 = smul.addr %s113, 8
          %s115 = scalar_lea.vmem [#allocation2], %s114
          %s116 = smul.u32 2, %s19
          %s118 = ssub.s32 128, 128
          %119 = vsyncadd %s112, %s118
          %s120 = smul.addr %s18, 2
          %s121 = sadd.s32 %s116, %s120
          %s122 = smul.addr %s17, 2
          %s123 = sadd.s32 %s121, %s122
          %s124 = smul.addr %s123, 64
          %s125 = scalar_lea.hbm %s0, %s124
          %s127 = sshll.u32 %s115, 4
          %s128 = int_to_ptr.vmem [resolvable:$true] %s127
          %130 = dma.hbm_to_vmem [thread:$0]  %s125, 128, %s128, %s112
        $region20: #{tpu_custom_call.1} parent=15 // pred_fallthru
          _
      $region16: #{tpu_custom_call.1} parent=5 // pred_fallthru
        _
      %p131 = scmp.le.s32.totalorder 1, %s10
      %p132 = scmp.lt.s32.totalorder %s10, 3
      %p133 = pnand %p131, %p132
      %p134 = pneg %p133
      // Predicated region
      $region21: #{tpu_custom_call.1} parent=5 // pred_check
        _
      $region22: #{tpu_custom_call.1} parent=5 // pred_check_branch
        %136 = sbr.rel (%p133) target = $region24
      $region23: #{tpu_custom_call.1} parent=5 // pred_region
        %s137 = ssub.s32 %s10, 1
        %s138 = sand.u32 %s46, 1
        %s139 = scalar_lea.sflag [#allocation3], %s138
        %s140 = sand.u32 %s46, 1
        %s141 = smul.addr %s140, 8
        %s142 = scalar_lea.vmem [#allocation2], %s141
        // Predicated region
        $region25: #{tpu_custom_call.1} parent=23 // pred_check
          %p143 = pneg %p59
        $region26: #{tpu_custom_call.1} parent=23 // pred_check_branch
          %145 = sbr.rel (%p143) target = $region28
        $region27: #{tpu_custom_call.1} parent=23 // pred_region
          %146 = dma.done %s139, 128
        $region28: #{tpu_custom_call.1} parent=23 // pred_fallthru
          _
        %s147 = sand.u32 %s46, 1
        %s148 = scalar_lea.sflag [#allocation3], %s147
        %s149 = sand.u32 %s46, 1
        %s150 = smul.addr %s149, 8
        %s151 = scalar_lea.vmem [#allocation2], %s150
        %p152 = pneg %p59
        %p153 = pneg %p56
        %p154 = pneg %p89
        %p155 = pneg %p86
        %s156 = smul.u32 32, %s22
        %p157 = scmp.lt.s32.totalorder %s20, 1
        %s158 = scalar_select %p157, %s20, 1
        %p159 = scmp.lt.s32.totalorder %s156, 31
        %s160 = scalar_select %p159, %s156, 31
        %p161 = scmp.lt.s32.totalorder %s21, 0
        %s162 = scalar_select %p161, %s21, 0
        %s163 = sadd.s32 %s162, %s160
        %s164 = smul.addr %s158, 32
        %s165 = sadd.s32 %s163, %s164
        %s166 = smul.addr %s165, 8
        %s167 = scalar_lea.vmem %s1, %s166
        %s168 = smul.u32 2, %s22
        %s169 = smul.u32 32, %s22
        %p170 = scmp.lt.s32.totalorder %s20, 1
        %s171 = scalar_select %p170, %s20, 1
        %p172 = scmp.lt.s32.totalorder %s169, 31
        %s173 = scalar_select %p172, %s169, 31
        %p174 = scmp.lt.s32.totalorder %s21, 0
        %s175 = scalar_select %p174, %s21, 0
        %s176 = sadd.s32 %s175, %s173
        %s177 = smul.addr %s171, 32
        %s178 = sadd.s32 %s176, %s177
        %s179 = smul.addr %s178, 8
        %s180 = scalar_lea.vmem %s1, %s179
        %s181 = smul.u32 32, %s22
        %v182 = vld [vmem:[%s142] sm:$0xff]
        %v184 = vcombine.high %v182, %v182
        %186 = vxpose.xlu0.b32.start [1/16] %v182, 128
        %187 = vxpose.xlu0.b32.cont [2/16] 0.0, 128
        %188 = vxpose.xlu0.b32.cont [3/16] 0.0, 128
        %189 = vxpose.xlu0.b32.cont [4/16] 0.0, 128
        %190 = vxpose.xlu0.b32.cont [5/16] 0.0, 128
        %191 = vxpose.xlu0.b32.cont [6/16] 0.0, 128
        %192 = vxpose.xlu0.b32.cont [7/16] 0.0, 128
        %193 = vxpose.xlu0.b32.cont [8/16] 0.0, 128
        %194 = vxpose.xlu0.b32.cont [9/16] 0.0, 128
        %195 = vxpose.xlu0.b32.cont [10/16] 0.0, 128
        %196 = vxpose.xlu0.b32.cont [11/16] 0.0, 128
        %197 = vxpose.xlu0.b32.cont [12/16] 0.0, 128
        %198 = vxpose.xlu0.b32.cont [13/16] 0.0, 128
        %199 = vxpose.xlu0.b32.cont [14/16] 0.0, 128
        %200 = vxpose.xlu0.b32.cont [15/16] 0.0, 128
        %201 = vxpose.xlu0.b32.end [16/16] 0.0, 128
        %v202 = vpop.trf.xlu0
        %v203 = vpop.trf.xlu0
        %v204 = vpop.trf.xlu0
        %v205 = vpop.trf.xlu0
        %v206 = vpop.trf.xlu0
        %v207 = vpop.trf.xlu0
        %v208 = vpop.trf.xlu0
        %v209 = vpop.trf.xlu0
        %v210 = vpop.trf.xlu0
        %v211 = vpop.trf.xlu0
        %v212 = vpop.trf.xlu0
        %v213 = vpop.trf.xlu0
        %v214 = vpop.trf.xlu0
        %v215 = vpop.trf.xlu0
        %v216 = vpop.trf.xlu0
        %v217 = vpop.trf.xlu0
        %218 = vxpose.xlu0.b32.start [1/16] %v184, 128
        %219 = vxpose.xlu0.b32.cont [2/16] 0.0, 128
        %220 = vxpose.xlu0.b32.cont [3/16] 0.0, 128
        %221 = vxpose.xlu0.b32.cont [4/16] 0.0, 128
        %222 = vxpose.xlu0.b32.cont [5/16] 0.0, 128
        %223 = vxpose.xlu0.b32.cont [6/16] 0.0, 128
        %224 = vxpose.xlu0.b32.cont [7/16] 0.0, 128
        %225 = vxpose.xlu0.b32.cont [8/16] 0.0, 128
        %226 = vxpose.xlu0.b32.cont [9/16] 0.0, 128
        %227 = vxpose.xlu0.b32.cont [10/16] 0.0, 128
        %228 = vxpose.xlu0.b32.cont [11/16] 0.0, 128
        %229 = vxpose.xlu0.b32.cont [12/16] 0.0, 128
        %230 = vxpose.xlu0.b32.cont [13/16] 0.0, 128
        %231 = vxpose.xlu0.b32.cont [14/16] 0.0, 128
        %232 = vxpose.xlu0.b32.cont [15/16] 0.0, 128
        %233 = vxpose.xlu0.b32.end [16/16] 0.0, 128
        %v234 = vpop.trf.xlu0
        %v235 = vpop.trf.xlu0
        %v236 = vpop.trf.xlu0
        %v237 = vpop.trf.xlu0
        %v238 = vpop.trf.xlu0
        %v239 = vpop.trf.xlu0
        %v240 = vpop.trf.xlu0
        %v241 = vpop.trf.xlu0
        %v242 = vpop.trf.xlu0
        %v243 = vpop.trf.xlu0
        %v244 = vpop.trf.xlu0
        %v245 = vpop.trf.xlu0
        %v246 = vpop.trf.xlu0
        %v247 = vpop.trf.xlu0
        %v248 = vpop.trf.xlu0
        %v249 = vpop.trf.xlu0
        %vm250 = vcmask 31744
        %251 = vst.msk [vmem:[%s180] sm:$0xff] %vm250, %v202
        %252 = vst.msk [vmem:[%s180 + $0x8] sm:$0xff] %vm250, %v203
        %253 = vst.msk [vmem:[%s180 + $0x10] sm:$0xff] %vm250, %v204
        %254 = vst.msk [vmem:[%s180 + $0x18] sm:$0xff] %vm250, %v205
        %255 = vst.msk [vmem:[%s180 + $0x20] sm:$0xff] %vm250, %v206
        %256 = vst.msk [vmem:[%s180 + $0x28] sm:$0xff] %vm250, %v207
        %257 = vst.msk [vmem:[%s180 + $0x30] sm:$0xff] %vm250, %v208
        %258 = vst.msk [vmem:[%s180 + $0x38] sm:$0xff] %vm250, %v209
        %259 = vst.msk [vmem:[%s180 + $0x40] sm:$0xff] %vm250, %v210
        %260 = vst.msk [vmem:[%s180 + $0x48] sm:$0xff] %vm250, %v211
        %261 = vst.msk [vmem:[%s180 + $0x50] sm:$0xff] %vm250, %v212
        %262 = vst.msk [vmem:[%s180 + $0x58] sm:$0xff] %vm250, %v213
        %263 = vst.msk [vmem:[%s180 + $0x60] sm:$0xff] %vm250, %v214
        %264 = vst.msk [vmem:[%s180 + $0x68] sm:$0xff] %vm250, %v215
        %265 = vst.msk [vmem:[%s180 + $0x70] sm:$0xff] %vm250, %v216
        %266 = vst.msk [vmem:[%s180 + $0x78] sm:$0xff] %vm250, %v217
        %267 = vst.msk [vmem:[%s180 + $0x80] sm:$0xff] %vm250, %v234
        %268 = vst.msk [vmem:[%s180 + $0x88] sm:$0xff] %vm250, %v235
        %269 = vst.msk [vmem:[%s180 + $0x90] sm:$0xff] %vm250, %v236
        %270 = vst.msk [vmem:[%s180 + $0x98] sm:$0xff] %vm250, %v237
        %271 = vst.msk [vmem:[%s180 + $0xa0] sm:$0xff] %vm250, %v238
        %272 = vst.msk [vmem:[%s180 + $0xa8] sm:$0xff] %vm250, %v239
        %273 = vst.msk [vmem:[%s180 + $0xb0] sm:$0xff] %vm250, %v240
        %274 = vst.msk [vmem:[%s180 + $0xb8] sm:$0xff] %vm250, %v241
        %275 = vst.msk [vmem:[%s180 + $0xc0] sm:$0xff] %vm250, %v242
        %276 = vst.msk [vmem:[%s180 + $0xc8] sm:$0xff] %vm250, %v243
        %277 = vst.msk [vmem:[%s180 + $0xd0] sm:$0xff] %vm250, %v244
        %278 = vst.msk [vmem:[%s180 + $0xd8] sm:$0xff] %vm250, %v245
        %279 = vst.msk [vmem:[%s180 + $0xe0] sm:$0xff] %vm250, %v246
        %280 = vst.msk [vmem:[%s180 + $0xe8] sm:$0xff] %vm250, %v247
        %281 = vst.msk [vmem:[%s180 + $0xf0] sm:$0xff] %vm250, %v248
        %282 = vst.msk [vmem:[%s180 + $0xf8] sm:$0xff] %vm250, %v249
        %s283 = smul.u32 32, %s22
        %p284 = scmp.lt.s32.totalorder %s20, 1
        %s285 = scalar_select %p284, %s20, 1
        %p286 = scmp.lt.s32.totalorder %s283, 31
        %s287 = scalar_select %p286, %s283, 31
        %p288 = scmp.lt.s32.totalorder %s21, 0
        %s289 = scalar_select %p288, %s21, 0
        %s290 = sadd.s32 %s289, %s287
        %s291 = smul.addr %s285, 32
        %s292 = sadd.s32 %s290, %s291
        %s293 = smul.addr %s292, 8
        %s294 = scalar_lea.vmem %s1, %s293
        // Predicated region
        $region29: #{tpu_custom_call.1} parent=23 // pred_check
          %p295 = pneg %p86
        $region30: #{tpu_custom_call.1} parent=23 // pred_check_branch
          %297 = sbr.rel (%p295) target = $region32
        $region31: #{tpu_custom_call.1} parent=23 // pred_region
          %s298 = smul.u32 32, %s22
        $region32: #{tpu_custom_call.1} parent=23 // pred_fallthru
          _
      $region24: #{tpu_custom_call.1} parent=5 // pred_fallthru
        _
      %p299 = scmp.le.s32.totalorder 2, %s10
      // Predicated region
      $region33: #{tpu_custom_call.1} parent=5 // pred_check
        %p300 = pneg %p299
      $region34: #{tpu_custom_call.1} parent=5 // pred_check_branch
        %302 = sbr.rel (%p300) target = $region36
      $region35: #{tpu_custom_call.1} parent=5 // pred_region
        %s303 = ssub.s32 %s10, 2
        // Predicated region
        $region37: #{tpu_custom_call.1} parent=35 // pred_check
          %p304 = pneg %p92
        $region38: #{tpu_custom_call.1} parent=35 // pred_check_branch
          %306 = sbr.rel (%p304) target = $region40
        $region39: #{tpu_custom_call.1} parent=35 // pred_region
          %s307 = smul.u32 32, %s25
          %p308 = scmp.lt.s32.totalorder %s23, 1
          %s309 = scalar_select %p308, %s23, 1
          %p310 = scmp.lt.s32.totalorder %s307, 31
          %s311 = scalar_select %p310, %s307, 31
          %p312 = scmp.lt.s32.totalorder %s24, 0
          %s313 = scalar_select %p312, %s24, 0
          %s314 = sadd.s32 %s313, %s311
          %s315 = smul.addr %s309, 32
          %s316 = sadd.s32 %s314, %s315
          %s317 = smul.addr %s316, 8
          %s318 = scalar_lea.vmem %s1, %s317
        $region40: #{tpu_custom_call.1} parent=35 // pred_fallthru
          _
      $region36: #{tpu_custom_call.1} parent=5 // pred_fallthru
        _
    $region6: #{tpu_custom_call.1} parent=1 // loop_footer
      %s14 = sadd.s32 1, %s10
    $region7: #{tpu_custom_call.1} parent=1 // loop_footer_branch
      %9 = sbr.rel target = $region3
    $region8: #{tpu_custom_call.1} parent=1 // loop_exit
      _
    %319 = vsyncpa [#allocation3], 1
    %s320 = scalar_lea.sflag [#allocation3], 1
    %321 = vsyncpa %s320, 1

</llo_original>
